<compile_context>
chip_gen: v6e
topology: v6e:2x2x1
jax: 0.10.0
libtpu: 0.0.40
codegen_flags: <defaults>
</compile_context>

<pallas_src>
import jax
import jax.numpy as jnp
from jax.experimental import pallas as pl
from jax.experimental.pallas import tpu as pltpu

_TARGET_BLOCK_BYTES = 2 * 1024 * 1024   # ~2 MiB block -> ~85%+ HBM roofline
_PREFERRED_LANES = 512                  # multiple of 128 -> unmasked vst


def _swish_kernel(x_ref, o_ref):
    # Compute in f32 (v5e has no bf16 VPU/EUP); sigmoid lowers to the EUP
    # logistic path, so the VALU slot stays free. Cast back at the end.
    xf = x_ref[...].astype(jnp.float32)
    o_ref[...] = (xf * jax.nn.sigmoid(xf)).astype(o_ref.dtype)


def _round_up(v, m):
    return ((v + m - 1) // m) * m


def _swish_slab(slab):
    """Run the kernel over a lane-dense (rows, lanes) slab."""
    rows, lanes = slab.shape
    itemsize = jnp.dtype(slab.dtype).itemsize

    # Constant-byte blocks regardless of lane width (4096x128 == 1024x512 for f32).
    block_rows = max(8, (_TARGET_BLOCK_BYTES // (lanes * itemsize)) // 8 * 8)

    if rows < 8:
        # Full-extent block (exempt from the (8,128) divisibility rule).
        br = rows
    else:
        # Cap at ceil(rows/2) rounded to a multiple of 8 so medium inputs
        # produce >= 2 grid steps -> both v7x TensorCores engage.
        half = _round_up((rows + 1) // 2, 8)
        br = min(block_rows, half)

    grid = ((rows + br - 1) // br,)  # partial last block is fine (elementwise)

    return pl.pallas_call(
        _swish_kernel,
        out_shape=jax.ShapeDtypeStruct(slab.shape, slab.dtype),
        grid_spec=pltpu.PrefetchScalarGridSpec(
            num_scalar_prefetch=0,
            grid=grid,
            in_specs=[pl.BlockSpec((br, lanes), lambda i: (i, 0))],
            out_specs=pl.BlockSpec((br, lanes), lambda i: (i, 0)),
        ),
        compiler_params=pltpu.CompilerParams(
            dimension_semantics=("parallel",),
            vmem_limit_bytes=32 * 1024 * 1024,
        ),
    )(slab)


@jax.jit
def swish(x):
    """Elementwise Swish / SiLU: x * sigmoid(x) for any floating shape/dtype."""
    if not jnp.issubdtype(x.dtype, jnp.floating):
        raise TypeError(f"swish expects a floating dtype, got {x.dtype}")

    orig_shape = x.shape
    n = x.size
    if n == 0:
        return x

    flat = jnp.ravel(x)
    main_n = (n // 128) * 128
    tail_n = n - main_n

    pieces = []
    if main_n > 0:
        lanes = _PREFERRED_LANES if main_n % _PREFERRED_LANES == 0 else 128
        slab = flat[:main_n].reshape(main_n // lanes, lanes)
        pieces.append(_swish_slab(slab).reshape(-1))
    if tail_n > 0:
        # <128-element remainder handled with plain jnp (fuses under jit);
        # avoids the old pad + slice round trip (extra full HBM read+write).
        tf = flat[main_n:].astype(jnp.float32)
        pieces.append((tf * jax.nn.sigmoid(tf)).astype(x.dtype))

    out = pieces[0] if len(pieces) == 1 else jnp.concatenate(pieces)
    return out.reshape(orig_shape)


def _ref_swish(x):
    return x * jax.nn.sigmoid(x)


if __name__ == "__main__":
    key = jax.random.PRNGKey(0)

    # NCHW input, matching the PyTorch convention in efficientNet.py.
    x = jax.random.normal(key, (2, 4, 16, 16), dtype=jnp.float32)
    y = swish(x)
    jax.block_until_ready(y)
    assert y.shape == x.shape and y.dtype == x.dtype
    assert jnp.max(jnp.abs(y - _ref_swish(x))) < 1e-5

    # Non-128-divisible size: whole thing goes through the jnp tail path.
    x2 = jax.random.normal(jax.random.PRNGKey(1), (3, 5, 7), dtype=jnp.float32)
    y2 = swish(x2)
    jax.block_until_ready(y2)
    assert y2.shape == x2.shape and y2.dtype == x2.dtype
    assert jnp.max(jnp.abs(y2 - _ref_swish(x2))) < 1e-5

    # 128-lane fallback + partial last grid block + <128-element tail:
    # n = 128*1030 + 37 -> rows=1030, br=520, grid=2 (last block partial).
    x3 = jax.random.normal(jax.random.PRNGKey(2), (128 * 1030 + 37,),
                           dtype=jnp.float32)
    y3 = swish(x3)
    jax.block_until_ready(y3)
    assert y3.shape == x3.shape and y3.dtype == x3.dtype
    assert jnp.max(jnp.abs(y3 - _ref_swish(x3))) < 1e-5

    print("KERNEL_OK")
</pallas_src>

<mosaic_0001>
module attributes {stable_mosaic.version = 11 : i64} {
  func.func @_swish_kernel(%arg0: i32, %arg1: memref<4x512xf32, #tpu.memory_space<vmem>>, %arg2: memref<4x512xf32, #tpu.memory_space<vmem>>) attributes {dimension_semantics = [#tpu.dimension_semantics<parallel>], iteration_bounds = array<i64: 1>, scalar_prefetch = 0 : i64, scratch_operands = 0 : i64, tpu.core_type = #tpu.core_type<tc>, window_params = [{transform_indices = @transform_0, window_bounds = array<i64: 4, 512>}, {transform_indices = @transform_1, window_bounds = array<i64: 4, 512>}]} {
    %c0 = arith.constant 0 : index
    %c0_0 = arith.constant 0 : index
    %0 = vector.load %arg1[%c0, %c0_0] : memref<4x512xf32, #tpu.memory_space<vmem>>, vector<4x512xf32>
    %1 = arith.negf %0 : vector<4x512xf32>
    %2 = math.exp %1 : vector<4x512xf32>
    %cst = arith.constant 1.000000e+00 : f32
    %3 = vector.broadcast %cst : f32 to vector<4x512xf32>
    %4 = arith.addf %3, %2 : vector<4x512xf32>
    %5 = arith.divf %3, %4 : vector<4x512xf32>
    %6 = arith.mulf %0, %5 : vector<4x512xf32>
    %c0_1 = arith.constant 0 : index
    %c0_2 = arith.constant 0 : index
    %7 = vector.load %arg2[%c0_1, %c0_2] : memref<4x512xf32, #tpu.memory_space<vmem>>, vector<4x512xf32>
    tpu.vector_store %arg2[%c0_1, %c0_2], %6 {strides = array<i32>} : memref<4x512xf32, #tpu.memory_space<vmem>>, vector<4x512xf32>,
    return
  }
  func.func @transform_0(%arg0: i32) -> (i32, i32) {
    %c0_i32 = arith.constant 0 : i32
    %c0_i32_0 = arith.constant 0 : i32
    return %arg0, %c0_i32 : i32, i32
  }
  func.func @transform_1(%arg0: i32) -> (i32, i32) {
    %c0_i32 = arith.constant 0 : i32
    %c0_i32_0 = arith.constant 0 : i32
    return %arg0, %c0_i32 : i32, i32
  }
}

</mosaic_0001>

<llo_original>
// kernel: swish.1
$region0: #{swish.1}
  #allocation0 [shape = 'u32[]', space=smem, size = 0x4, offset = 0x4, fixed_abs, tag = 'smem constant byte address 0x4 - core index']
  #allocation1 [shape = 'u32[144,128]{1,0:T(1,128)}', space=vmem, size = 0x12000, scoped, tag = 'internal scratch']
  %s0 = inlined_call_operand.vmem [shape: f32[4,512], index: 0, kind: input, shape index: {}]
  %s1 = inlined_call_operand.vmem [shape: f32[4,512], index: 1, kind: output, shape index: {}]
  %s2 = sld [smem:[#allocation0]]
  $region14: #{swish.1} parent=0
    _
  %s4 = ssub.s32 1, %s2
  %s5 = scalar_select 0, %s4, %s2
  // Predicated region
  $region2: #{swish.1} parent=0 // pred_check
    _
  $region3: #{swish.1} parent=0 // pred_check_branch
    %7 = sbr.rel (0) target = $region5
  $region4: #{swish.1} parent=0 // pred_region
    _
  $region5: #{swish.1} parent=0 // pred_fallthru
    _
  %v8 = vld [vmem:[%s0] sm:$0xff]
  %v9 = vld [vmem:[%s0 + $0x8] sm:$0xff]
  %v10 = vxor.u32 %v8, 2147483648
  %v11 = vxor.u32 %v9, 2147483648
  %v12 = vmul.f32 %v10, 1.442695
  %v13 = vpow.pop %v12
  %v14 = vmul.f32 %v11, 1.442695
  %v15 = vpow.pop %v14
  %v16 = vadd.f32 %v13, 1.0
  %v17 = vadd.f32 %v15, 1.0
  %v18 = vrcp.pop %v16
  %v19 = vmul.f32 1.0, %v18
  %v20 = vrcp.pop %v17
  %v21 = vmul.f32 1.0, %v20
  %v22 = vmul.f32 %v8, %v19
  %v23 = vmul.f32 %v9, %v21
  %24 = vst [vmem:[%s1] sm:$0xff] %v22
  %25 = vst [vmem:[%s1 + $0x8] sm:$0xff] %v23
  // Predicated region
  $region6: #{swish.1} parent=0 // pred_check
    _
  $region7: #{swish.1} parent=0 // pred_check_branch
    %27 = sbr.rel (0) target = $region9
  $region8: #{swish.1} parent=0 // pred_region
    _
  $region9: #{swish.1} parent=0 // pred_fallthru
    _
  // Predicated region
  $region10: #{swish.1} parent=0 // pred_check
    _
  $region11: #{swish.1} parent=0 // pred_check_branch
    %29 = sbr.rel (0) target = $region13
  $region12: #{swish.1} parent=0 // pred_region
    _
  $region13: #{swish.1} parent=0 // pred_fallthru
    _

</llo_original>
